<compile_context>
chip_gen: v5e
topology: v5e:2x2
jax: 0.10.0
libtpu: 0.0.40
codegen_flags: <defaults>
</compile_context>

<pallas_src>
import jax
import jax.numpy as jnp
import numpy as np
from jax.experimental import pallas as pl
from jax.experimental.pallas import tpu as pltpu  # noqa: F401  (TPU backend)

BN_EPS = 1e-5


def conv_bn_relu_kernel(p_ref, w_ref, g_ref, beta_ref, o_ref):
    """Fused im2col-matmul conv + BatchNorm2d(batch stats) + ReLU.

    Channel-on-sublane / flattened-spatial-on-lane layout:
      p_ref:    (KH*KW*Cin, P)    im2col patches, P = N*Ho*Wo (lane-dense)
      w_ref:    (Cout, KH*KW*Cin) flattened conv weight
      g_ref:    (Cout, 1)         BN gamma
      beta_ref: (Cout, 1)         BN beta
      o_ref:    (Cout, P)         lane-dense output
    """
    # One MXU matmul replaces the unrolled per-(kh, kw, ci) VPU MAC loop.
    acc = jnp.dot(w_ref[...], p_ref[...], preferred_element_type=jnp.float32)  # (Cout, P)

    # NOTE: Conv2d bias is intentionally omitted: a per-channel constant shift
    # cancels exactly under training-mode BatchNorm (mean subtraction), and the
    # variance is shift-invariant, so the result is unchanged up to rounding.

    # BatchNorm2d training-mode batch statistics: per-channel (sublane row)
    # mean / biased variance over all N*Ho*Wo positions (the lane axis).
    mean = jnp.mean(acc, axis=1, keepdims=True)                 # (Cout, 1)
    centered = acc - mean                                        # reused: var + xhat
    var = jnp.mean(centered * centered, axis=1, keepdims=True)   # (Cout, 1)
    scale = g_ref[...] * jax.lax.rsqrt(var + BN_EPS)             # gamma folded in (EUP rsqrt)
    y = centered * scale + beta_ref[...]

    # ReLU + lane-dense store.
    o_ref[...] = jnp.maximum(y, 0.0).astype(o_ref.dtype)


def conv_layer_forward(x_nchw, weight_oihw, bias, gamma, beta):
    """ConvLayer.forward equivalent. x_nchw: (N, Cin, H, W) -> (N, Cout, Ho, Wo).

    `bias` is accepted for API parity with nn.Conv2d(bias=True) but is not
    passed to the kernel: it cancels exactly under train-mode BatchNorm.
    """
    # TODO(synk): Dropout2d path for dropout > 0 is not implemented (default dropout=0 disables it).
    del bias
    n, cin, h, w = x_nchw.shape
    cout, _, kh, kw = weight_oihw.shape
    ho, wo = h - kh + 1, w - kw + 1
    p_cols = n * ho * wo

    x = x_nchw.astype(jnp.float32)

    # im2col: patches[(kh_i*KW + kw_i)*Cin + ci, n*Ho*Wo + oh*Wo + ow]
    #             = x[n, ci, oh + kh_i, ow + kw_i]
    taps = [x[:, :, i:i + ho, j:j + wo] for i in range(kh) for j in range(kw)]
    patches = jnp.stack(taps, axis=0)                   # (KH*KW, N, Cin, Ho, Wo)
    patches = jnp.transpose(patches, (0, 2, 1, 3, 4))   # (KH*KW, Cin, N, Ho, Wo)
    patches = patches.reshape(kh * kw * cin, p_cols)    # (36, 392)  channel-on-sublane

    # (Cout, Cin, KH, KW) -> (Cout, KH, KW, Cin) -> (Cout, KH*KW*Cin)  (matches row order above)
    w_mat = jnp.transpose(weight_oihw, (0, 2, 3, 1)).reshape(cout, kh * kw * cin)
    w_mat = w_mat.astype(jnp.float32)
    g2 = gamma.reshape(cout, 1).astype(jnp.float32)
    be2 = beta.reshape(cout, 1).astype(jnp.float32)

    def full(shape):
        # Whole-array block (block_shape == array shape), single grid point.
        return pl.BlockSpec(shape, lambda i: (0,) * len(shape))

    out_cp = pl.pallas_call(
        conv_bn_relu_kernel,
        grid=(1,),
        in_specs=[
            full((kh * kw * cin, p_cols)),   # patches (36, 392)
            full((cout, kh * kw * cin)),     # weight  (8, 36)
            full((cout, 1)),                 # gamma   (8, 1)
            full((cout, 1)),                 # beta    (8, 1)
        ],
        out_specs=full((cout, p_cols)),      # lane-dense (8, 392)
        out_shape=jax.ShapeDtypeStruct((cout, p_cols), jnp.float32),
    )(patches, w_mat, g2, be2)

    # (Cout, N*Ho*Wo) -> (N, Cout, Ho, Wo)
    return jnp.transpose(out_cp.reshape(cout, n, ho, wo), (1, 0, 2, 3))


def reference_forward(x_nchw, weight_oihw, bias, gamma, beta):
    """Pure-JAX reference (XLA conv + bias + train-mode BN + ReLU) for validation."""
    y = jax.lax.conv_general_dilated(
        x_nchw.astype(jnp.float32), weight_oihw.astype(jnp.float32),
        window_strides=(1, 1), padding="VALID",
        dimension_numbers=("NCHW", "OIHW", "NCHW"))
    y = y + bias.reshape(1, -1, 1, 1)
    mean = jnp.mean(y, axis=(0, 2, 3), keepdims=True)
    var = jnp.mean(jnp.square(y - mean), axis=(0, 2, 3), keepdims=True)
    y = (y - mean) * jax.lax.rsqrt(var + BN_EPS)
    y = y * gamma.reshape(1, -1, 1, 1) + beta.reshape(1, -1, 1, 1)
    return jnp.maximum(y, 0.0)


if __name__ == "__main__":
    # Small shapes consistent with the module: ConvLayer(in_channels=4, out_channels=8)
    N, CIN, COUT, H, W, K = 2, 4, 8, 16, 16, 3

    key = jax.random.PRNGKey(0)
    kx, kw_, kb = jax.random.split(key, 3)

    x = jax.random.normal(kx, (N, CIN, H, W), dtype=jnp.float32)
    weight = 0.1 * jax.random.normal(kw_, (COUT, CIN, K, K), dtype=jnp.float32)
    bias = 0.1 * jax.random.normal(kb, (COUT,), dtype=jnp.float32)
    gamma = jnp.ones((COUT,), dtype=jnp.float32)
    beta = jnp.zeros((COUT,), dtype=jnp.float32)

    out = conv_layer_forward(x, weight, bias, gamma, beta)
    out = jax.block_until_ready(out)

    ref = jax.block_until_ready(reference_forward(x, weight, bias, gamma, beta))
    np.testing.assert_allclose(np.asarray(out), np.asarray(ref), atol=1e-4, rtol=1e-4)

    print("KERNEL_OK")
</pallas_src>

<mosaic_0001>
module attributes {stable_mosaic.version = 11 : i64} {
  func.func @conv_bn_relu_kernel(%arg0: i32, %arg1: memref<36x392xf32, #tpu.memory_space<vmem>>, %arg2: memref<8x36xf32, #tpu.memory_space<vmem>>, %arg3: memref<8x1xf32, #tpu.memory_space<vmem>>, %arg4: memref<8x1xf32, #tpu.memory_space<vmem>>, %arg5: memref<8x392xf32, #tpu.memory_space<vmem>>) attributes {dimension_semantics = [#tpu.dimension_semantics<arbitrary>], iteration_bounds = array<i64: 1>, scalar_prefetch = 0 : i64, scratch_operands = 0 : i64, tpu.core_type = #tpu.core_type<tc>, window_params = [{pipeline_mode = #tpu.pipeline_mode<synchronous>, transform_indices = @transform_0, window_bounds = array<i64: 36, 392>}, {pipeline_mode = #tpu.pipeline_mode<synchronous>, transform_indices = @transform_1, window_bounds = array<i64: 8, 36>}, {pipeline_mode = #tpu.pipeline_mode<synchronous>, transform_indices = @transform_2, window_bounds = array<i64: 8, 1>}, {pipeline_mode = #tpu.pipeline_mode<synchronous>, transform_indices = @transform_3, window_bounds = array<i64: 8, 1>}, {pipeline_mode = #tpu.pipeline_mode<synchronous>, transform_indices = @transform_4, window_bounds = array<i64: 8, 392>}]} {
    %c0 = arith.constant 0 : index
    %c0_0 = arith.constant 0 : index
    %0 = vector.load %arg2[%c0, %c0_0] : memref<8x36xf32, #tpu.memory_space<vmem>>, vector<8x36xf32>
    %c0_1 = arith.constant 0 : index
    %c0_2 = arith.constant 0 : index
    %1 = vector.load %arg1[%c0_1, %c0_2] : memref<36x392xf32, #tpu.memory_space<vmem>>, vector<36x392xf32>
    %cst = arith.constant dense<0.000000e+00> : vector<8x392xf32>
    %2 = tpu.matmul %0, %1, %cst {dimension_numbers = #tpu.dot_dimension_numbers<[1], [0], [0], [1], [0, 0, 1, 1], [], []>} : vector<8x36xf32>, vector<36x392xf32>, vector<8x392xf32> -> vector<8x392xf32>
    %cst_3 = arith.constant dense<0.000000e+00> : vector<8xf32>
    %3 = vector.multi_reduction <add>, %2, %cst_3 [1] : vector<8x392xf32> to vector<8xf32>
    %4 = vector.shape_cast %3 : vector<8xf32> to vector<8x1xf32>
    %cst_4 = arith.constant 3.920000e+02 : f32
    %5 = vector.broadcast %cst_4 : f32 to vector<8x1xf32>
    %6 = arith.divf %4, %5 : vector<8x1xf32>
    %7 = vector.broadcast %6 : vector<8x1xf32> to vector<8x392xf32>
    %8 = arith.subf %2, %7 : vector<8x392xf32>
    %9 = arith.mulf %8, %8 : vector<8x392xf32>
    %cst_5 = arith.constant dense<0.000000e+00> : vector<8xf32>
    %10 = vector.multi_reduction <add>, %9, %cst_5 [1] : vector<8x392xf32> to vector<8xf32>
    %11 = vector.shape_cast %10 : vector<8xf32> to vector<8x1xf32>
    %cst_6 = arith.constant 3.920000e+02 : f32
    %12 = vector.broadcast %cst_6 : f32 to vector<8x1xf32>
    %13 = arith.divf %11, %12 : vector<8x1xf32>
    %c0_7 = arith.constant 0 : index
    %c0_8 = arith.constant 0 : index
    %14 = vector.load %arg3[%c0_7, %c0_8] : memref<8x1xf32, #tpu.memory_space<vmem>>, vector<8x1xf32>
    %cst_9 = arith.constant 9.99999974E-6 : f32
    %15 = vector.broadcast %cst_9 : f32 to vector<8x1xf32>
    %16 = arith.addf %13, %15 : vector<8x1xf32>
    %17 = math.rsqrt %16 : vector<8x1xf32>
    %18 = arith.mulf %14, %17 : vector<8x1xf32>
    %19 = vector.broadcast %18 : vector<8x1xf32> to vector<8x392xf32>
    %20 = arith.mulf %8, %19 : vector<8x392xf32>
    %c0_10 = arith.constant 0 : index
    %c0_11 = arith.constant 0 : index
    %21 = vector.load %arg4[%c0_10, %c0_11] : memref<8x1xf32, #tpu.memory_space<vmem>>, vector<8x1xf32>
    %22 = vector.broadcast %21 : vector<8x1xf32> to vector<8x392xf32>
    %23 = arith.addf %20, %22 : vector<8x392xf32>
    %cst_12 = arith.constant 0.000000e+00 : f32
    %24 = vector.broadcast %cst_12 : f32 to vector<8x392xf32>
    %25 = arith.maximumf %23, %24 : vector<8x392xf32>
    %c0_13 = arith.constant 0 : index
    %c0_14 = arith.constant 0 : index
    %26 = vector.load %arg5[%c0_13, %c0_14] : memref<8x392xf32, #tpu.memory_space<vmem>>, vector<8x392xf32>
    tpu.vector_store %arg5[%c0_13, %c0_14], %25 {strides = array<i32>} : memref<8x392xf32, #tpu.memory_space<vmem>>, vector<8x392xf32>,
    return
  }
  func.func @transform_0(%arg0: i32) -> (i32, i32) {
    %c0_i32 = arith.constant 0 : i32
    %c0_i32_0 = arith.constant 0 : i32
    %c0_i32_1 = arith.constant 0 : i32
    return %c0_i32, %c0_i32_0 : i32, i32
  }
  func.func @transform_1(%arg0: i32) -> (i32, i32) {
    %c0_i32 = arith.constant 0 : i32
    %c0_i32_0 = arith.constant 0 : i32
    %c0_i32_1 = arith.constant 0 : i32
    return %c0_i32, %c0_i32_0 : i32, i32
  }
  func.func @transform_2(%arg0: i32) -> (i32, i32) {
    %c0_i32 = arith.constant 0 : i32
    %c0_i32_0 = arith.constant 0 : i32
    %c0_i32_1 = arith.constant 0 : i32
    return %c0_i32, %c0_i32_0 : i32, i32
  }
  func.func @transform_3(%arg0: i32) -> (i32, i32) {
    %c0_i32 = arith.constant 0 : i32
    %c0_i32_0 = arith.constant 0 : i32
    %c0_i32_1 = arith.constant 0 : i32
    return %c0_i32, %c0_i32_0 : i32, i32
  }
  func.func @transform_4(%arg0: i32) -> (i32, i32) {
    %c0_i32 = arith.constant 0 : i32
    %c0_i32_0 = arith.constant 0 : i32
    %c0_i32_1 = arith.constant 0 : i32
    return %c0_i32, %c0_i32_0 : i32, i32
  }
}

</mosaic_0001>

<llo_original>
// kernel: tpu_custom_call.1
$region0: #{tpu_custom_call.1}
  #allocation0 [shape = 'u32[]', space=smem, size = 0x4, offset = 0x4, fixed_abs, tag = 'smem constant byte address 0x4 - core index']
  #allocation1 [shape = 'u32[72,128]{1,0:T(1,128)}', space=vmem, size = 0x9000, scoped, tag = 'internal scratch']
  %s0 = inlined_call_operand.hbm [shape: f32[36,392], index: 0, kind: input, shape index: {}]
  %s1 = inlined_call_operand.vmem [shape: f32[8,36], index: 1, kind: input, shape index: {}]
  %s2 = inlined_call_operand.vmem [shape: f32[8,1], index: 2, kind: input, shape index: {}]
  %s3 = inlined_call_operand.vmem [shape: f32[8,1], index: 3, kind: input, shape index: {}]
  %s4 = inlined_call_operand.hbm [shape: f32[8,392], index: 4, kind: output, shape index: {}]
  %s5 = sld [smem:[#allocation0]]
  $region30: #{tpu_custom_call.1} parent=0
    _
  %s7 = ssub.s32 1, %s5
  %s8 = scalar_select 0, %s7, %s5
  $region1: #{tpu_custom_call.1} parent=0
    #allocation2 [shape = 'u8[81920]{0}', space=vmem, size = 0x14000, scoped, tag = 'input window, operand 0, single buffered']
    #allocation3 [shape = 's32[1]{0}', space=sflag, size = 0x4, scoped, tag = 'scoped memory for tpu_custom_call.1']
    #allocation4 [shape = 's32[1]{0}', space=sflag, size = 0x4, scoped, tag = 'scoped memory for tpu_custom_call.1']
    #allocation5 [shape = 'u8[16384]{0}', space=vmem, size = 0x4000, scoped, tag = 'output window, operand 0, single buffered']
    %9 = vsyncpa [#allocation3], 0
    %10 = vsyncpa [#allocation4], 0
    // Predicated region
    $region2: #{tpu_custom_call.1} parent=1 // pred_check
      _
    $region3: #{tpu_custom_call.1} parent=1 // pred_check_branch
      %12 = sbr.rel (0) target = $region5
    $region4: #{tpu_custom_call.1} parent=1 // pred_region
      %14 = vsyncadd [#allocation3], 0
      %s15 = sshll.u32 %s0, 4
      %s16 = int_to_ptr.hbm [resolvable:$true] %s15
      %s17 = sshll.u32 [#allocation2], 4
      %s18 = int_to_ptr.vmem [resolvable:$true] %s17
      %23 = dma.hbm_to_vmem [thread:$0]  %s16, 2560, %s18, [#allocation3], 512, 512, 32
    $region5: #{tpu_custom_call.1} parent=1 // pred_fallthru
      _
    // Predicated region
    $region6: #{tpu_custom_call.1} parent=1 // pred_check
      _
    $region7: #{tpu_custom_call.1} parent=1 // pred_check_branch
      %25 = sbr.rel (0) target = $region9
    $region8: #{tpu_custom_call.1} parent=1 // pred_region
      _
    $region9: #{tpu_custom_call.1} parent=1 // pred_fallthru
      _
    // Predicated region
    $region10: #{tpu_custom_call.1} parent=1 // pred_check
      _
    $region11: #{tpu_custom_call.1} parent=1 // pred_check_branch
      %27 = sbr.rel (0) target = $region13
    $region12: #{tpu_custom_call.1} parent=1 // pred_region
      _
    $region13: #{tpu_custom_call.1} parent=1 // pred_fallthru
      _
    // Predicated region
    $region14: #{tpu_custom_call.1} parent=1 // pred_check
      _
    $region15: #{tpu_custom_call.1} parent=1 // pred_check_branch
      %29 = sbr.rel (0) target = $region17
    $region16: #{tpu_custom_call.1} parent=1 // pred_region
      _
    $region17: #{tpu_custom_call.1} parent=1 // pred_fallthru
      _
    // Predicated region
    $region18: #{tpu_custom_call.1} parent=1 // pred_check
      _
    $region19: #{tpu_custom_call.1} parent=1 // pred_check_branch
      %31 = sbr.rel (0) target = $region21
    $region20: #{tpu_custom_call.1} parent=1 // pred_region
      %33 = dma.done [#allocation3], 2560
    $region21: #{tpu_custom_call.1} parent=1 // pred_fallthru
      _
    %v34 = vld [vmem:[%s1] sm:$0xff]
    %v35 = vld [vmem:[#allocation2] sm:$0xff]
    %v36 = vld [vmem:[#allocation2 + $0x8] sm:$0xff]
    %v37 = vld [vmem:[#allocation2 + $0x10] sm:$0xff]
    %v38 = vld [vmem:[#allocation2 + $0x18] sm:$0xff]
    %v39 = vld [vmem:[#allocation2 + $0x20] sm:$0xff]
    %v40 = vld [vmem:[#allocation2 + $0x28] sm:$0xff]
    %v41 = vld [vmem:[#allocation2 + $0x30] sm:$0xff]
    %v42 = vld [vmem:[#allocation2 + $0x38] sm:$0xff]
    %v43 = vld [vmem:[#allocation2 + $0x40] sm:$0xff]
    %v44 = vld [vmem:[#allocation2 + $0x48] sm:$0xff]
    %v45 = vld [vmem:[#allocation2 + $0x50] sm:$0xff]
    %v46 = vld [vmem:[#allocation2 + $0x58] sm:$0xff]
    %v47 = vld [vmem:[#allocation2 + $0x60] sm:$0xff]
    %v48 = vld [vmem:[#allocation2 + $0x68] sm:$0xff]
    %v49 = vld [vmem:[#allocation2 + $0x70] sm:$0xff]
    %v50 = vld [vmem:[#allocation2 + $0x78] sm:$0xff]
    %v51 = vld [vmem:[#allocation2 + $0x80] sm:$0xf]
    %v52 = vld [vmem:[#allocation2 + $0x88] sm:$0xf]
    %v53 = vld [vmem:[#allocation2 + $0x90] sm:$0xf]
    %v54 = vld [vmem:[#allocation2 + $0x98] sm:$0xf]
    %vm55 = vcmask 293888
    %v57 = vsel %vm55, %v34, 0
    %vm59 = vcmask 1043456
    %v61 = vsel %vm59, %v51, 0
    %v64 = vsel %vm59, %v52, 0
    %v67 = vsel %vm59, %v53, 0
    %v70 = vsel %vm59, %v54, 0
    %72 = vmatpush.msra.mxu0 0.0
    %73 = vmatpush.msra.mxu0 0.0
    %74 = vmatpush.msra.mxu0 0.0
    %75 = vmatpush.msra.mxu0 0.0
    %76 = vmatpush.msra.mxu0 0.0
    %77 = vmatpush.msra.mxu0 0.0
    %78 = vmatpush.msra.mxu0 0.0
    %79 = vmatpush.msra.mxu0 0.0
    %80 = vmatpush.msra.mxu0 0.0
    %81 = vmatpush.msra.mxu0 0.0
    %82 = vmatpush.msra.mxu0 0.0
    %83 = vmatpush.msra.mxu0 %v61
    %84 = vmatpush.msra.mxu0 %v47
    %85 = vmatpush.msra.mxu0 %v43
    %86 = vmatpush.msra.mxu0 %v39
    %87 = vmatpush.msra.mxu0 %v35
    %88 = vmatmul.f32.gmra.mxu0 %v57
    %v89 = vpop.f32.mrf.mxu0
    %v90 = vadd.f32 0.0, %v89
    %91 = vdwg.mxu0
    %92 = vmatpush.msra.mxu0 0.0
    %93 = vmatpush.msra.mxu0 0.0
    %94 = vmatpush.msra.mxu0 0.0
    %95 = vmatpush.msra.mxu0 0.0
    %96 = vmatpush.msra.mxu0 0.0
    %97 = vmatpush.msra.mxu0 0.0
    %98 = vmatpush.msra.mxu0 0.0
    %99 = vmatpush.msra.mxu0 0.0
    %100 = vmatpush.msra.mxu0 0.0
    %101 = vmatpush.msra.mxu0 0.0
    %102 = vmatpush.msra.mxu0 0.0
    %103 = vmatpush.msra.mxu0 %v64
    %104 = vmatpush.msra.mxu0 %v48
    %105 = vmatpush.msra.mxu0 %v44
    %106 = vmatpush.msra.mxu0 %v40
    %107 = vmatpush.msra.mxu0 %v36
    %108 = vmatmul.f32.gmra.mxu0 %v57
    %v109 = vpop.f32.mrf.mxu0
    %v110 = vadd.f32 0.0, %v109
    %111 = vdwg.mxu0
    %112 = vmatpush.msra.mxu0 0.0
    %113 = vmatpush.msra.mxu0 0.0
    %114 = vmatpush.msra.mxu0 0.0
    %115 = vmatpush.msra.mxu0 0.0
    %116 = vmatpush.msra.mxu0 0.0
    %117 = vmatpush.msra.mxu0 0.0
    %118 = vmatpush.msra.mxu0 0.0
    %119 = vmatpush.msra.mxu0 0.0
    %120 = vmatpush.msra.mxu0 0.0
    %121 = vmatpush.msra.mxu0 0.0
    %122 = vmatpush.msra.mxu0 0.0
    %123 = vmatpush.msra.mxu0 %v67
    %124 = vmatpush.msra.mxu0 %v49
    %125 = vmatpush.msra.mxu0 %v45
    %126 = vmatpush.msra.mxu0 %v41
    %127 = vmatpush.msra.mxu0 %v37
    %128 = vmatmul.f32.gmra.mxu0 %v57
    %v129 = vpop.f32.mrf.mxu0
    %v130 = vadd.f32 0.0, %v129
    %131 = vdwg.mxu0
    %132 = vmatpush.msra.mxu0 0.0
    %133 = vmatpush.msra.mxu0 0.0
    %134 = vmatpush.msra.mxu0 0.0
    %135 = vmatpush.msra.mxu0 0.0
    %136 = vmatpush.msra.mxu0 0.0
    %137 = vmatpush.msra.mxu0 0.0
    %138 = vmatpush.msra.mxu0 0.0
    %139 = vmatpush.msra.mxu0 0.0
    %140 = vmatpush.msra.mxu0 0.0
    %141 = vmatpush.msra.mxu0 0.0
    %142 = vmatpush.msra.mxu0 0.0
    %143 = vmatpush.msra.mxu0 %v70
    %144 = vmatpush.msra.mxu0 %v50
    %145 = vmatpush.msra.mxu0 %v46
    %146 = vmatpush.msra.mxu0 %v42
    %147 = vmatpush.msra.mxu0 %v38
    %148 = vmatmul.f32.gmra.mxu0 %v57
    %v149 = vpop.f32.mrf.mxu0
    %v150 = vadd.f32 0.0, %v149
    %151 = vdwg.mxu0
    %v152 = vadd.f32 %v90, %v110
    %v153 = vadd.f32 %v152, %v130
    %vm154 = vcmask 64512
    %v155 = vsel %vm154, %v150, 0.0
    %v156 = vadd.f32 %v153, %v155
    %157 = vadd.xlane.f32.xlu0 %v156
    %v158 = vpop.xlane.xlu0 %157
    %v159 = vrcp.pop 392.0
    %v160 = vmul.f32 392.0, %v159
    %v161 = vsub.f32 1.0, %v160
    %v162 = vmul.f32 %v159, %v161
    %v163 = vadd.f32 %v159, %v162
    %vm164 = vweird.f32 %v159
    %v165 = vsel %vm164, %v159, %v163
    %v166 = vmul.f32 %v158, %v165
    %v167 = vsub.f32 %v90, %v166
    %v168 = vsub.f32 %v110, %v166
    %v169 = vsub.f32 %v130, %v166
    %v170 = vsub.f32 %v150, %v166
    %v171 = vmul.f32 %v167, %v167
    %v172 = vmul.f32 %v168, %v168
    %v173 = vmul.f32 %v169, %v169
    %v174 = vmul.f32 %v170, %v170
    %v175 = vadd.f32 %v171, %v172
    %v176 = vadd.f32 %v175, %v173
    %v177 = vsel %vm154, %v174, 0.0
    %v178 = vadd.f32 %v176, %v177
    %179 = vadd.xlane.f32.xlu0 %v178
    %v180 = vpop.xlane.xlu0 %179
    %v181 = vmul.f32 %v180, %v165
    %v182 = vld [vmem:[%s2] sm:$0xff]
    %v183 = vadd.f32 %v181, 1e-05
    %v184 = vrsqrt.pop %v183
    %v185 = vmul.f32 %v184, %v183
    %v186 = vmul.f32 %v185, %v184
    %v187 = vmul.f32 0.5, %v186
    %v188 = vsub.f32 1.5, %v187
    %v189 = vmul.f32 %v184, %v188
    %vm190 = vweird.f32 %v183
    %vm191 = vweird.f32 %v184
    %vm192 = vmor %vm190, %vm191
    %v193 = vsel %vm192, %v184, %v189
    %v194 = vmul.f32 %v182, %v193
    %196 = vset.pattern.permute.xlu0 0
    %197 = vperm.xlu0 %196, %v194
    %v198 = vpop.permute.xlu0 %197
    %v200 = vmul.f32 %v167, %v198
    %v201 = vmul.f32 %v168, %v198
    %v202 = vmul.f32 %v169, %v198
    %v203 = vmul.f32 %v170, %v198
    %v204 = vld [vmem:[%s3] sm:$0xff]
    %206 = vset.pattern.permute.xlu0 0
    %207 = vperm.xlu0 %206, %v204
    %v208 = vpop.permute.xlu0 %207
    %v210 = vadd.f32 %v200, %v208
    %v211 = vadd.f32 %v201, %v208
    %v212 = vadd.f32 %v202, %v208
    %v213 = vadd.f32 %v203, %v208
    %v214 = vmax.f32 %v210, 0.0
    %v215 = vmax.f32 %v211, 0.0
    %v216 = vmax.f32 %v212, 0.0
    %v217 = vmax.f32 %v213, 0.0
    %218 = vst [vmem:[#allocation5] sm:$0xff] %v214
    %219 = vst [vmem:[#allocation5 + $0x8] sm:$0xff] %v215
    %220 = vst [vmem:[#allocation5 + $0x10] sm:$0xff] %v216
    %221 = vst.msk [vmem:[#allocation5 + $0x18] sm:$0xff] %vm154, %v217
    // Predicated region
    $region22: #{tpu_custom_call.1} parent=1 // pred_check
      _
    $region23: #{tpu_custom_call.1} parent=1 // pred_check_branch
      %223 = sbr.rel (0) target = $region25
    $region24: #{tpu_custom_call.1} parent=1 // pred_region
      %225 = vsyncadd [#allocation4], 0
      %s227 = sshll.u32 [#allocation5], 4
      %s228 = int_to_ptr.vmem [resolvable:$true] %s227
      %s229 = sshll.u32 %s4, 4
      %s230 = int_to_ptr.hbm [resolvable:$true] %s229
      %232 = dma.vmem_to_hbm [thread:$0]  %s228, 512, %s230, [#allocation4]
    $region25: #{tpu_custom_call.1} parent=1 // pred_fallthru
      _
    // Predicated region
    $region26: #{tpu_custom_call.1} parent=1 // pred_check
      _
    $region27: #{tpu_custom_call.1} parent=1 // pred_check_branch
      %234 = sbr.rel (0) target = $region29
    $region28: #{tpu_custom_call.1} parent=1 // pred_region
      %236 = dma.done [#allocation4], 512
    $region29: #{tpu_custom_call.1} parent=1 // pred_fallthru
      _
    %237 = vsyncpa [#allocation3], 1
    %238 = vsyncpa [#allocation4], 1

</llo_original>
